<compile_context>
chip_gen: v5e
topology: v5e:2x2
jax: 0.10.0
libtpu: 0.0.40
codegen_flags: <defaults>
</compile_context>

<pallas_src>
import math

import jax
import jax.numpy as jnp
from jax.experimental import pallas as pl
from jax.experimental.pallas import tpu as pltpu


def _mhsa_kernel(x_ref, wq_ref, wk_ref, wv_ref, bq_ref, bk_ref, bv_ref,
                 wo_ref, bo_ref, o_ref):
    # x_ref:  (1, T, D)   one batch element
    # wq/wk/wv_ref: (H, D, dk)   per-head projection weights (input-major)
    # bq/bk/bv_ref: (H, 1, dk)   per-head projection biases
    # wo_ref: (H, dk, D)  per-head slice of the output projection
    # bo_ref: (1, D)      output-projection bias
    # o_ref:  (1, T, D)
    nhead, _, dk = wq_ref.shape
    scale = 1.0 / math.sqrt(dk)

    x = x_ref[0]                                       # (T, D)
    t, d = x.shape
    xb = jnp.broadcast_to(x, (nhead, t, d))            # hoisted once, (H, T, D)

    # Head-batched projections: one MXU contraction each (batch dim = head).
    q = jnp.einsum('htd,hdc->htc', xb, wq_ref[...],
                   preferred_element_type=jnp.float32) + bq_ref[...]   # (H, T, dk)
    k = jnp.einsum('htd,hdc->htc', xb, wk_ref[...],
                   preferred_element_type=jnp.float32) + bk_ref[...]   # (H, T, dk)
    v = jnp.einsum('htd,hdc->htc', xb, wv_ref[...],
                   preferred_element_type=jnp.float32) + bv_ref[...]   # (H, T, dk)

    # scores = q @ k^T * scale for all heads at once: (H, T, T)
    s = jnp.einsum('hqc,hkc->hqk', q, k,
                   preferred_element_type=jnp.float32) * scale

    # TODO(synk): optional `mask` argument of the PyTorch module is not implemented
    #             (mask=None path only); it would be an additive -inf before the softmax.
    # Numerically-stable softmax over the key axis.
    m = jnp.max(s, axis=-1, keepdims=True)             # XLU reduction
    p = jnp.exp(s - m)                                 # EUP
    l = jnp.sum(p, axis=-1, keepdims=True)             # XLU reduction
    attn = p * pl.reciprocal(l, approx=True)           # EUP approx reciprocal

    ctx = jnp.einsum('hqk,hkc->hqc', attn, v,
                     preferred_element_type=jnp.float32)               # (H, T, dk)

    # Output projection: per-head partials ctx_h @ Wo_h, reduced over heads, plus bias.
    o_heads = jnp.einsum('hqc,hcd->hqd', ctx, wo_ref[...],
                         preferred_element_type=jnp.float32)           # (H, T, D)
    out = jnp.sum(o_heads, axis=0) + bo_ref[...]                       # (T, D)

    o_ref[0] = out.astype(o_ref.dtype)


def multi_head_self_attention(x, wq, bq, wk, bk, wv, bv, wo, bo, *, nhead,
                              dropout_p: float = 0.0):
    """Pallas equivalent of MultiHeadSelfAttention.forward (inference, mask=None).

    Weights follow the PyTorch nn.Linear convention: W is (out_features, in_features),
    y = x @ W.T + b.
    """
    b, t, d = x.shape
    assert d % nhead == 0
    dk = d // nhead

    # Pre-layout weights per head so the kernel only indexes the leading head axis
    # (layout plumbing stays in the wrapper; the kernel never lane-slices the model dim).
    def _per_head_in(w):   # (D_out, D_in) -> (H, D_in, dk)
        return w.T.reshape(d, nhead, dk).transpose(1, 0, 2)

    wq_h = _per_head_in(wq)
    wk_h = _per_head_in(wk)
    wv_h = _per_head_in(wv)
    bq_h = bq.reshape(nhead, 1, dk)
    bk_h = bk.reshape(nhead, 1, dk)
    bv_h = bv.reshape(nhead, 1, dk)
    wo_h = wo.T.reshape(nhead, dk, d)     # (H, dk, D)
    bo_2d = bo.reshape(1, d)

    # TODO(synk): training-mode dropout (p > 0) is not implemented; with p == 0 (or eval
    #             mode) dropout is the identity, which is what we compute.
    del dropout_p

    # Constant index_map -> same block every grid step -> weights stay VMEM-resident.
    full = lambda a: pl.BlockSpec(a.shape, lambda i: (0,) * a.ndim)

    out = pl.pallas_call(
        _mhsa_kernel,
        out_shape=jax.ShapeDtypeStruct((b, t, d), x.dtype),
        grid_spec=pltpu.PrefetchScalarGridSpec(
            num_scalar_prefetch=0,
            grid=(b,),
            in_specs=[
                pl.BlockSpec((1, t, d), lambda i: (i, 0, 0)),   # x: one batch element/step
                full(wq_h), full(wk_h), full(wv_h),
                full(bq_h), full(bk_h), full(bv_h),
                full(wo_h), full(bo_2d),
            ],
            out_specs=pl.BlockSpec((1, t, d), lambda i: (i, 0, 0)),
        ),
        compiler_params=pltpu.CompilerParams(
            dimension_semantics=("parallel",),
        ),
    )(x, wq_h, wk_h, wv_h, bq_h, bk_h, bv_h, wo_h, bo_2d)
    return out


def _reference(x, wq, bq, wk, bk, wv, bv, wo, bo, nhead):
    """Plain-JAX reference matching the PyTorch module (eval mode, mask=None)."""
    b, t, d = x.shape
    dk = d // nhead
    q = (x @ wq.T + bq).reshape(b, t, nhead, dk).transpose(0, 2, 1, 3)
    k = (x @ wk.T + bk).reshape(b, t, nhead, dk).transpose(0, 2, 1, 3)
    v = (x @ wv.T + bv).reshape(b, t, nhead, dk).transpose(0, 2, 1, 3)
    s = jnp.einsum("bhqd,bhkd->bhqk", q, k) / math.sqrt(dk)
    attn = jax.nn.softmax(s, axis=-1)
    o = jnp.einsum("bhqk,bhkd->bhqd", attn, v)
    o = o.transpose(0, 2, 1, 3).reshape(b, t, d)
    return o @ wo.T + bo


if __name__ == "__main__":
    # Small shapes consistent with the module: batch=2, seq=8, d_model=32, nhead=4.
    B, T, D, H = 2, 8, 32, 4

    key = jax.random.PRNGKey(0)
    keys = jax.random.split(key, 9)
    bound = 1.0 / math.sqrt(D)

    def init(k, shape):
        return jax.random.uniform(k, shape, jnp.float32, minval=-bound, maxval=bound)

    x = jax.random.normal(keys[0], (B, T, D), dtype=jnp.float32)
    wq, bq = init(keys[1], (D, D)), init(keys[2], (D,))
    wk, bk = init(keys[3], (D, D)), init(keys[4], (D,))
    wv, bv = init(keys[5], (D, D)), init(keys[6], (D,))
    wo, bo = init(keys[7], (D, D)), init(keys[8], (D,))

    out = multi_head_self_attention(x, wq, bq, wk, bk, wv, bv, wo, bo, nhead=H)
    out = jax.block_until_ready(out)

    ref = _reference(x, wq, bq, wk, bk, wv, bv, wo, bo, H)
    assert out.shape == (B, T, D)
    # Tolerance accounts for pl.reciprocal(approx=True) in the softmax normalization.
    assert jnp.allclose(out, ref, atol=1e-2, rtol=1e-2), "mismatch vs reference"

    print("KERNEL_OK")
</pallas_src>

<mosaic_0001>
module attributes {stable_mosaic.version = 11 : i64} {
  func.func @_mhsa_kernel(%arg0: i32, %arg1: memref<1x8x32xf32, #tpu.memory_space<vmem>>, %arg2: memref<4x32x8xf32, #tpu.memory_space<vmem>>, %arg3: memref<4x32x8xf32, #tpu.memory_space<vmem>>, %arg4: memref<4x32x8xf32, #tpu.memory_space<vmem>>, %arg5: memref<4x1x8xf32, #tpu.memory_space<vmem>>, %arg6: memref<4x1x8xf32, #tpu.memory_space<vmem>>, %arg7: memref<4x1x8xf32, #tpu.memory_space<vmem>>, %arg8: memref<4x8x32xf32, #tpu.memory_space<vmem>>, %arg9: memref<1x32xf32, #tpu.memory_space<vmem>>, %arg10: memref<1x8x32xf32, #tpu.memory_space<vmem>>) attributes {dimension_semantics = [#tpu.dimension_semantics<parallel>], iteration_bounds = array<i64: 2>, scalar_prefetch = 0 : i64, scratch_operands = 0 : i64, tpu.core_type = #tpu.core_type<tc>, window_params = [{transform_indices = @transform_0, window_bounds = array<i64: 1, 8, 32>}, {pipeline_mode = #tpu.pipeline_mode<synchronous>, transform_indices = @transform_1, window_bounds = array<i64: 4, 32, 8>}, {pipeline_mode = #tpu.pipeline_mode<synchronous>, transform_indices = @transform_2, window_bounds = array<i64: 4, 32, 8>}, {pipeline_mode = #tpu.pipeline_mode<synchronous>, transform_indices = @transform_3, window_bounds = array<i64: 4, 32, 8>}, {pipeline_mode = #tpu.pipeline_mode<synchronous>, transform_indices = @transform_4, window_bounds = array<i64: 4, 1, 8>}, {pipeline_mode = #tpu.pipeline_mode<synchronous>, transform_indices = @transform_5, window_bounds = array<i64: 4, 1, 8>}, {pipeline_mode = #tpu.pipeline_mode<synchronous>, transform_indices = @transform_6, window_bounds = array<i64: 4, 1, 8>}, {pipeline_mode = #tpu.pipeline_mode<synchronous>, transform_indices = @transform_7, window_bounds = array<i64: 4, 8, 32>}, {pipeline_mode = #tpu.pipeline_mode<synchronous>, transform_indices = @transform_8, window_bounds = array<i64: 1, 32>}, {transform_indices = @transform_9, window_bounds = array<i64: 1, 8, 32>}]} {
    %c0 = arith.constant 0 : index
    %c0_0 = arith.constant 0 : index
    %c0_1 = arith.constant 0 : index
    %0 = vector.load %arg1[%c0, %c0_0, %c0_1] : memref<1x8x32xf32, #tpu.memory_space<vmem>>, vector<1x8x32xf32>
    %1 = vector.shape_cast %0 : vector<1x8x32xf32> to vector<8x32xf32>
    %2 = vector.shape_cast %1 : vector<8x32xf32> to vector<1x8x32xf32>
    %3 = vector.broadcast %2 : vector<1x8x32xf32> to vector<4x8x32xf32>
    %c0_2 = arith.constant 0 : index
    %c0_3 = arith.constant 0 : index
    %c0_4 = arith.constant 0 : index
    %4 = vector.load %arg2[%c0_2, %c0_3, %c0_4] : memref<4x32x8xf32, #tpu.memory_space<vmem>>, vector<4x32x8xf32>
    "tpu.trace_start"() <{level = 10 : i32, message = "htd,hdc->htc"}> : () -> ()
    %cst = arith.constant dense<0.000000e+00> : vector<4x8x8xf32>
    %5 = tpu.matmul %3, %4, %cst {dimension_numbers = #tpu.dot_dimension_numbers<[2], [1], [1], [2], [0, 0, 0, 1, 1, 2], [0], [0]>} : vector<4x8x32xf32>, vector<4x32x8xf32>, vector<4x8x8xf32> -> vector<4x8x8xf32>
    "tpu.trace_stop"() : () -> ()
    %c0_5 = arith.constant 0 : index
    %c0_6 = arith.constant 0 : index
    %c0_7 = arith.constant 0 : index
    %6 = vector.load %arg5[%c0_5, %c0_6, %c0_7] : memref<4x1x8xf32, #tpu.memory_space<vmem>>, vector<4x1x8xf32>
    %7 = vector.broadcast %6 : vector<4x1x8xf32> to vector<4x8x8xf32>
    %8 = arith.addf %5, %7 : vector<4x8x8xf32>
    %c0_8 = arith.constant 0 : index
    %c0_9 = arith.constant 0 : index
    %c0_10 = arith.constant 0 : index
    %9 = vector.load %arg3[%c0_8, %c0_9, %c0_10] : memref<4x32x8xf32, #tpu.memory_space<vmem>>, vector<4x32x8xf32>
    "tpu.trace_start"() <{level = 10 : i32, message = "htd,hdc->htc"}> : () -> ()
    %cst_11 = arith.constant dense<0.000000e+00> : vector<4x8x8xf32>
    %10 = tpu.matmul %3, %9, %cst_11 {dimension_numbers = #tpu.dot_dimension_numbers<[2], [1], [1], [2], [0, 0, 0, 1, 1, 2], [0], [0]>} : vector<4x8x32xf32>, vector<4x32x8xf32>, vector<4x8x8xf32> -> vector<4x8x8xf32>
    "tpu.trace_stop"() : () -> ()
    %c0_12 = arith.constant 0 : index
    %c0_13 = arith.constant 0 : index
    %c0_14 = arith.constant 0 : index
    %11 = vector.load %arg6[%c0_12, %c0_13, %c0_14] : memref<4x1x8xf32, #tpu.memory_space<vmem>>, vector<4x1x8xf32>
    %12 = vector.broadcast %11 : vector<4x1x8xf32> to vector<4x8x8xf32>
    %13 = arith.addf %10, %12 : vector<4x8x8xf32>
    %c0_15 = arith.constant 0 : index
    %c0_16 = arith.constant 0 : index
    %c0_17 = arith.constant 0 : index
    %14 = vector.load %arg4[%c0_15, %c0_16, %c0_17] : memref<4x32x8xf32, #tpu.memory_space<vmem>>, vector<4x32x8xf32>
    "tpu.trace_start"() <{level = 10 : i32, message = "htd,hdc->htc"}> : () -> ()
    %cst_18 = arith.constant dense<0.000000e+00> : vector<4x8x8xf32>
    %15 = tpu.matmul %3, %14, %cst_18 {dimension_numbers = #tpu.dot_dimension_numbers<[2], [1], [1], [2], [0, 0, 0, 1, 1, 2], [0], [0]>} : vector<4x8x32xf32>, vector<4x32x8xf32>, vector<4x8x8xf32> -> vector<4x8x8xf32>
    "tpu.trace_stop"() : () -> ()
    %c0_19 = arith.constant 0 : index
    %c0_20 = arith.constant 0 : index
    %c0_21 = arith.constant 0 : index
    %16 = vector.load %arg7[%c0_19, %c0_20, %c0_21] : memref<4x1x8xf32, #tpu.memory_space<vmem>>, vector<4x1x8xf32>
    %17 = vector.broadcast %16 : vector<4x1x8xf32> to vector<4x8x8xf32>
    %18 = arith.addf %15, %17 : vector<4x8x8xf32>
    "tpu.trace_start"() <{level = 10 : i32, message = "hqc,hkc->hqk"}> : () -> ()
    %cst_22 = arith.constant dense<0.000000e+00> : vector<4x8x8xf32>
    %19 = tpu.matmul %8, %13, %cst_22 {dimension_numbers = #tpu.dot_dimension_numbers<[2], [2], [1], [1], [0, 0, 0, 1, 1, 1], [0], [0]>} : vector<4x8x8xf32>, vector<4x8x8xf32>, vector<4x8x8xf32> -> vector<4x8x8xf32>
    "tpu.trace_stop"() : () -> ()
    %cst_23 = arith.constant 0.353553385 : f32
    %20 = vector.broadcast %cst_23 : f32 to vector<4x8x8xf32>
    %21 = arith.mulf %19, %20 : vector<4x8x8xf32>
    %cst_24 = arith.constant dense<0xFF800000> : vector<4x8xf32>
    %22 = vector.multi_reduction <maximumf>, %21, %cst_24 [2] : vector<4x8x8xf32> to vector<4x8xf32>
    %23 = vector.shape_cast %22 : vector<4x8xf32> to vector<4x8x1xf32>
    %24 = vector.broadcast %23 : vector<4x8x1xf32> to vector<4x8x8xf32>
    %25 = arith.subf %21, %24 : vector<4x8x8xf32>
    %26 = math.exp %25 : vector<4x8x8xf32>
    %cst_25 = arith.constant dense<0.000000e+00> : vector<4x8xf32>
    %27 = vector.multi_reduction <add>, %26, %cst_25 [2] : vector<4x8x8xf32> to vector<4x8xf32>
    %28 = vector.shape_cast %27 : vector<4x8xf32> to vector<4x8x1xf32>
    %29 = tpu.reciprocal %28 {approx = true} : vector<4x8x1xf32> -> vector<4x8x1xf32>
    %30 = vector.broadcast %29 : vector<4x8x1xf32> to vector<4x8x8xf32>
    %31 = arith.mulf %26, %30 : vector<4x8x8xf32>
    "tpu.trace_start"() <{level = 10 : i32, message = "hqk,hkc->hqc"}> : () -> ()
    %cst_26 = arith.constant dense<0.000000e+00> : vector<4x8x8xf32>
    %32 = tpu.matmul %31, %18, %cst_26 {dimension_numbers = #tpu.dot_dimension_numbers<[2], [1], [1], [2], [0, 0, 0, 1, 1, 2], [0], [0]>} : vector<4x8x8xf32>, vector<4x8x8xf32>, vector<4x8x8xf32> -> vector<4x8x8xf32>
    "tpu.trace_stop"() : () -> ()
    %c0_27 = arith.constant 0 : index
    %c0_28 = arith.constant 0 : index
    %c0_29 = arith.constant 0 : index
    %33 = vector.load %arg8[%c0_27, %c0_28, %c0_29] : memref<4x8x32xf32, #tpu.memory_space<vmem>>, vector<4x8x32xf32>
    "tpu.trace_start"() <{level = 10 : i32, message = "hqc,hcd->hqd"}> : () -> ()
    %cst_30 = arith.constant dense<0.000000e+00> : vector<4x8x32xf32>
    %34 = tpu.matmul %32, %33, %cst_30 {dimension_numbers = #tpu.dot_dimension_numbers<[2], [1], [1], [2], [0, 0, 0, 1, 1, 2], [0], [0]>} : vector<4x8x8xf32>, vector<4x8x32xf32>, vector<4x8x32xf32> -> vector<4x8x32xf32>
    "tpu.trace_stop"() : () -> ()
    %cst_31 = arith.constant dense<0.000000e+00> : vector<8x32xf32>
    %35 = vector.multi_reduction <add>, %34, %cst_31 [0] : vector<4x8x32xf32> to vector<8x32xf32>
    %c0_32 = arith.constant 0 : index
    %c0_33 = arith.constant 0 : index
    %36 = vector.load %arg9[%c0_32, %c0_33] : memref<1x32xf32, #tpu.memory_space<vmem>>, vector<1x32xf32>
    %37 = vector.broadcast %36 : vector<1x32xf32> to vector<8x32xf32>
    %38 = arith.addf %35, %37 : vector<8x32xf32>
    %c0_34 = arith.constant 0 : index
    %c0_35 = arith.constant 0 : index
    %c0_36 = arith.constant 0 : index
    %39 = vector.load %arg10[%c0_34, %c0_35, %c0_36] : memref<1x8x32xf32, #tpu.memory_space<vmem>>, vector<1x8x32xf32>
    %40 = vector.shape_cast %39 : vector<1x8x32xf32> to vector<8x32xf32>
    %41 = vector.shape_cast %38 : vector<8x32xf32> to vector<1x8x32xf32>
    tpu.vector_store %arg10[%c0_34, %c0_35, %c0_36], %41 {strides = array<i32>} : memref<1x8x32xf32, #tpu.memory_space<vmem>>, vector<1x8x32xf32>,
    return
  }
  func.func @transform_0(%arg0: i32) -> (i32, i32, i32) {
    %c0_i32 = arith.constant 0 : i32
    %c0_i32_0 = arith.constant 0 : i32
    %c0_i32_1 = arith.constant 0 : i32
    return %arg0, %c0_i32, %c0_i32_0 : i32, i32, i32
  }
  func.func @transform_1(%arg0: i32) -> (i32, i32, i32) {
    %c0_i32 = arith.constant 0 : i32
    %c0_i32_0 = arith.constant 0 : i32
    %c0_i32_1 = arith.constant 0 : i32
    %c0_i32_2 = arith.constant 0 : i32
    return %c0_i32, %c0_i32_0, %c0_i32_1 : i32, i32, i32
  }
  func.func @transform_2(%arg0: i32) -> (i32, i32, i32) {
    %c0_i32 = arith.constant 0 : i32
    %c0_i32_0 = arith.constant 0 : i32
    %c0_i32_1 = arith.constant 0 : i32
    %c0_i32_2 = arith.constant 0 : i32
    return %c0_i32, %c0_i32_0, %c0_i32_1 : i32, i32, i32
  }
  func.func @transform_3(%arg0: i32) -> (i32, i32, i32) {
    %c0_i32 = arith.constant 0 : i32
    %c0_i32_0 = arith.constant 0 : i32
    %c0_i32_1 = arith.constant 0 : i32
    %c0_i32_2 = arith.constant 0 : i32
    return %c0_i32, %c0_i32_0, %c0_i32_1 : i32, i32, i32
  }
  func.func @transform_4(%arg0: i32) -> (i32, i32, i32) {
    %c0_i32 = arith.constant 0 : i32
    %c0_i32_0 = arith.constant 0 : i32
    %c0_i32_1 = arith.constant 0 : i32
    %c0_i32_2 = arith.constant 0 : i32
    return %c0_i32, %c0_i32_0, %c0_i32_1 : i32, i32, i32
  }
  func.func @transform_5(%arg0: i32) -> (i32, i32, i32) {
    %c0_i32 = arith.constant 0 : i32
    %c0_i32_0 = arith.constant 0 : i32
    %c0_i32_1 = arith.constant 0 : i32
    %c0_i32_2 = arith.constant 0 : i32
    return %c0_i32, %c0_i32_0, %c0_i32_1 : i32, i32, i32
  }
  func.func @transform_6(%arg0: i32) -> (i32, i32, i32) {
    %c0_i32 = arith.constant 0 : i32
    %c0_i32_0 = arith.constant 0 : i32
    %c0_i32_1 = arith.constant 0 : i32
    %c0_i32_2 = arith.constant 0 : i32
    return %c0_i32, %c0_i32_0, %c0_i32_1 : i32, i32, i32
  }
  func.func @transform_7(%arg0: i32) -> (i32, i32, i32) {
    %c0_i32 = arith.constant 0 : i32
    %c0_i32_0 = arith.constant 0 : i32
    %c0_i32_1 = arith.constant 0 : i32
    %c0_i32_2 = arith.constant 0 : i32
    return %c0_i32, %c0_i32_0, %c0_i32_1 : i32, i32, i32
  }
  func.func @transform_8(%arg0: i32) -> (i32, i32) {
    %c0_i32 = arith.constant 0 : i32
    %c0_i32_0 = arith.constant 0 : i32
    %c0_i32_1 = arith.constant 0 : i32
    return %c0_i32, %c0_i32_0 : i32, i32
  }
  func.func @transform_9(%arg0: i32) -> (i32, i32, i32) {
    %c0_i32 = arith.constant 0 : i32
    %c0_i32_0 = arith.constant 0 : i32
    %c0_i32_1 = arith.constant 0 : i32
    return %arg0, %c0_i32, %c0_i32_0 : i32, i32, i32
  }
}

</mosaic_0001>

<llo_original>
// kernel: tpu_custom_call.1
$region0: #{tpu_custom_call.1}
  #allocation0 [shape = 'u32[]', space=smem, size = 0x4, offset = 0x4, fixed_abs, tag = 'smem constant byte address 0x4 - core index']
  #allocation1 [shape = 'u32[72,128]{1,0:T(1,128)}', space=vmem, size = 0x9000, scoped, tag = 'internal scratch']
  %s0 = inlined_call_operand.vmem [shape: f32[2,8,32], index: 0, kind: input, shape index: {}]
  %s1 = inlined_call_operand.vmem [shape: f32[4,32,8], index: 1, kind: input, shape index: {}]
  %s2 = inlined_call_operand.vmem [shape: f32[4,32,8], index: 2, kind: input, shape index: {}]
  %s3 = inlined_call_operand.vmem [shape: f32[4,32,8], index: 3, kind: input, shape index: {}]
  %s4 = inlined_call_operand.vmem [shape: f32[4,1,8], index: 4, kind: input, shape index: {}]
  %s5 = inlined_call_operand.vmem [shape: f32[4,1,8], index: 5, kind: input, shape index: {}]
  %s6 = inlined_call_operand.vmem [shape: f32[4,1,8], index: 6, kind: input, shape index: {}]
  %s7 = inlined_call_operand.vmem [shape: f32[4,8,32], index: 7, kind: input, shape index: {}]
  %s8 = inlined_call_operand.vmem [shape: f32[1,32], index: 8, kind: input, shape index: {}]
  %s9 = inlined_call_operand.hbm [shape: f32[2,8,32], index: 9, kind: output, shape index: {}]
  %s10 = sld [smem:[#allocation0]]
  $region69: #{tpu_custom_call.1} parent=0
    _
  %s12 = ssub.s32 1, %s10
  %s13 = scalar_select 0, %s12, %s10
  $region1: #{tpu_custom_call.1} parent=0
    #allocation2 [shape = 'u8[8192]{0}', space=vmem, size = 0x2000, scoped, tag = 'output window, operand 0']
    #allocation3 [shape = 's32[2]{0}', space=sflag, size = 0x8, scoped, tag = 'scoped memory for tpu_custom_call.1']
    %14 = vsyncpa [#allocation3], 0
    %s15 = scalar_lea.sflag [#allocation3], 1
    %16 = vsyncpa %s15, 0
    loop: start=0, step=1, limit=4
    $region2: #{tpu_custom_call.1} parent=1 // loop_pre_header
      _
    $region3: #{tpu_custom_call.1} parent=1 // loop_header
      %s18 = sphi 0, %s22
      %p19 = scmp.ge.s32.totalorder %s18, 4
      %s28 = sphi 0, %s30
      %s31 = sphi 0, %s28
      %s32 = sphi 0, %s31
      %s48 = sphi 0, %s32
      %s52 = sphi 0, %s52
      %s54 = sphi 0, %s52
      %s55 = sphi 0, %s54
      %s69 = sphi 0, %s55
      %s73 = sphi 0, %s73
      %s75 = sphi 0, %s73
      %s76 = sphi 0, %s75
      %s90 = sphi 0, %s76
      %s94 = sphi 0, %s94
      %s96 = sphi 0, %s94
      %s97 = sphi 0, %s96
      %s111 = sphi 0, %s97
      %s115 = sphi 0, %s115
      %s117 = sphi 0, %s115
      %s118 = sphi 0, %s117
      %s132 = sphi 0, %s118
      %s136 = sphi 0, %s136
      %s138 = sphi 0, %s136
      %s139 = sphi 0, %s138
      %s153 = sphi 0, %s139
      %s157 = sphi 0, %s157
      %s159 = sphi 0, %s157
      %s160 = sphi 0, %s159
      %s174 = sphi 0, %s160
      %s178 = sphi 0, %s178
      %s180 = sphi 0, %s178
      %s181 = sphi 0, %s180
      %s195 = sphi 0, %s181
      %s199 = sphi 0, %s199
      %s201 = sphi 0, %s199
      %s202 = sphi 0, %s201
      %s216 = sphi 0, %s202
      %s222 = sphi 0, %s224
      %s225 = sphi 0, %s222
      %s226 = sphi 0, %s225
      %s242 = sphi 0, %s226
    $region4: #{tpu_custom_call.1} parent=1 // loop_header_branch
      %21 = sbr.rel (%p19) target = $region8
    $region5: #{tpu_custom_call.1} parent=1 // loop_body
      %s23 = ssub.s32 %s18, 1
      %s24 = ssub.s32 %s18, 2
      %s25 = sadd.s32 %s18, 1
      %s26 = ssub.s32 %s18, %s25
      %p27 = scmp.eq.s32.totalorder %s26, 0
      %s29 = sadd.s32 %s28, 1
      %s30 = scalar_select %p27, %s28, %s29
      %p33 = pneg %p27
      %p34 = scmp.eq.s32.totalorder %s18, 1
      %p35 = por %p33, %p34
      %p36 = scmp.ne.s32.totalorder %s28, %s31
      %p37 = scmp.eq.s32.totalorder %s18, 0
      %p38 = por %p36, %p37
      %p39 = scmp.ne.s32.totalorder %s28, %s31
      %p40 = scmp.eq.s32.totalorder %s23, 1
      %p41 = por %p39, %p40
      %p42 = scmp.ne.s32.totalorder %s31, %s32
      %p43 = scmp.eq.s32.totalorder %s23, 0
      %p44 = por %p42, %p43
      %p45 = scmp.ne.s32.totalorder %s31, %s32
      %p46 = scmp.eq.s32.totalorder %s24, 1
      %p47 = por %p45, %p46
      %p49 = scmp.ne.s32.totalorder %s32, %s48
      %p50 = scmp.eq.s32.totalorder %s24, 0
      %p51 = por %p49, %p50
      %s53 = sadd.s32 %s52, 1
      %p56 = scmp.eq.s32.totalorder %s18, 1
      %p57 = scmp.ne.s32.totalorder %s52, %s54
      %p58 = scmp.eq.s32.totalorder %s18, 0
      %p59 = por %p57, %p58
      %p60 = scmp.ne.s32.totalorder %s52, %s54
      %p61 = scmp.eq.s32.totalorder %s23, 1
      %p62 = por %p60, %p61
      %p63 = scmp.ne.s32.totalorder %s54, %s55
      %p64 = scmp.eq.s32.totalorder %s23, 0
      %p65 = por %p63, %p64
      %p66 = scmp.ne.s32.totalorder %s54, %s55
      %p67 = scmp.eq.s32.totalorder %s24, 1
      %p68 = por %p66, %p67
      %p70 = scmp.ne.s32.totalorder %s55, %s69
      %p71 = scmp.eq.s32.totalorder %s24, 0
      %p72 = por %p70, %p71
      %s74 = sadd.s32 %s73, 1
      %p77 = scmp.eq.s32.totalorder %s18, 1
      %p78 = scmp.ne.s32.totalorder %s73, %s75
      %p79 = scmp.eq.s32.totalorder %s18, 0
      %p80 = por %p78, %p79
      %p81 = scmp.ne.s32.totalorder %s73, %s75
      %p82 = scmp.eq.s32.totalorder %s23, 1
      %p83 = por %p81, %p82
      %p84 = scmp.ne.s32.totalorder %s75, %s76
      %p85 = scmp.eq.s32.totalorder %s23, 0
      %p86 = por %p84, %p85
      %p87 = scmp.ne.s32.totalorder %s75, %s76
      %p88 = scmp.eq.s32.totalorder %s24, 1
      %p89 = por %p87, %p88
      %p91 = scmp.ne.s32.totalorder %s76, %s90
      %p92 = scmp.eq.s32.totalorder %s24, 0
      %p93 = por %p91, %p92
      %s95 = sadd.s32 %s94, 1
      %p98 = scmp.eq.s32.totalorder %s18, 1
      %p99 = scmp.ne.s32.totalorder %s94, %s96
      %p100 = scmp.eq.s32.totalorder %s18, 0
      %p101 = por %p99, %p100
      %p102 = scmp.ne.s32.totalorder %s94, %s96
      %p103 = scmp.eq.s32.totalorder %s23, 1
      %p104 = por %p102, %p103
      %p105 = scmp.ne.s32.totalorder %s96, %s97
      %p106 = scmp.eq.s32.totalorder %s23, 0
      %p107 = por %p105, %p106
      %p108 = scmp.ne.s32.totalorder %s96, %s97
      %p109 = scmp.eq.s32.totalorder %s24, 1
      %p110 = por %p108, %p109
      %p112 = scmp.ne.s32.totalorder %s97, %s111
      %p113 = scmp.eq.s32.totalorder %s24, 0
      %p114 = por %p112, %p113
      %s116 = sadd.s32 %s115, 1
      %p119 = scmp.eq.s32.totalorder %s18, 1
      %p120 = scmp.ne.s32.totalorder %s115, %s117
      %p121 = scmp.eq.s32.totalorder %s18, 0
      %p122 = por %p120, %p121
      %p123 = scmp.ne.s32.totalorder %s115, %s117
      %p124 = scmp.eq.s32.totalorder %s23, 1
      %p125 = por %p123, %p124
      %p126 = scmp.ne.s32.totalorder %s117, %s118
      %p127 = scmp.eq.s32.totalorder %s23, 0
      %p128 = por %p126, %p127
      %p129 = scmp.ne.s32.totalorder %s117, %s118
      %p130 = scmp.eq.s32.totalorder %s24, 1
      %p131 = por %p129, %p130
      %p133 = scmp.ne.s32.totalorder %s118, %s132
      %p134 = scmp.eq.s32.totalorder %s24, 0
      %p135 = por %p133, %p134
      %s137 = sadd.s32 %s136, 1
      %p140 = scmp.eq.s32.totalorder %s18, 1
      %p141 = scmp.ne.s32.totalorder %s136, %s138
      %p142 = scmp.eq.s32.totalorder %s18, 0
      %p143 = por %p141, %p142
      %p144 = scmp.ne.s32.totalorder %s136, %s138
      %p145 = scmp.eq.s32.totalorder %s23, 1
      %p146 = por %p144, %p145
      %p147 = scmp.ne.s32.totalorder %s138, %s139
      %p148 = scmp.eq.s32.totalorder %s23, 0
      %p149 = por %p147, %p148
      %p150 = scmp.ne.s32.totalorder %s138, %s139
      %p151 = scmp.eq.s32.totalorder %s24, 1
      %p152 = por %p150, %p151
      %p154 = scmp.ne.s32.totalorder %s139, %s153
      %p155 = scmp.eq.s32.totalorder %s24, 0
      %p156 = por %p154, %p155
      %s158 = sadd.s32 %s157, 1
      %p161 = scmp.eq.s32.totalorder %s18, 1
      %p162 = scmp.ne.s32.totalorder %s157, %s159
      %p163 = scmp.eq.s32.totalorder %s18, 0
      %p164 = por %p162, %p163
      %p165 = scmp.ne.s32.totalorder %s157, %s159
      %p166 = scmp.eq.s32.totalorder %s23, 1
      %p167 = por %p165, %p166
      %p168 = scmp.ne.s32.totalorder %s159, %s160
      %p169 = scmp.eq.s32.totalorder %s23, 0
      %p170 = por %p168, %p169
      %p171 = scmp.ne.s32.totalorder %s159, %s160
      %p172 = scmp.eq.s32.totalorder %s24, 1
      %p173 = por %p171, %p172
      %p175 = scmp.ne.s32.totalorder %s160, %s174
      %p176 = scmp.eq.s32.totalorder %s24, 0
      %p177 = por %p175, %p176
      %s179 = sadd.s32 %s178, 1
      %p182 = scmp.eq.s32.totalorder %s18, 1
      %p183 = scmp.ne.s32.totalorder %s178, %s180
      %p184 = scmp.eq.s32.totalorder %s18, 0
      %p185 = por %p183, %p184
      %p186 = scmp.ne.s32.totalorder %s178, %s180
      %p187 = scmp.eq.s32.totalorder %s23, 1
      %p188 = por %p186, %p187
      %p189 = scmp.ne.s32.totalorder %s180, %s181
      %p190 = scmp.eq.s32.totalorder %s23, 0
      %p191 = por %p189, %p190
      %p192 = scmp.ne.s32.totalorder %s180, %s181
      %p193 = scmp.eq.s32.totalorder %s24, 1
      %p194 = por %p192, %p193
      %p196 = scmp.ne.s32.totalorder %s181, %s195
      %p197 = scmp.eq.s32.totalorder %s24, 0
      %p198 = por %p196, %p197
      %s200 = sadd.s32 %s199, 1
      %p203 = scmp.eq.s32.totalorder %s18, 1
      %p204 = scmp.ne.s32.totalorder %s199, %s201
      %p205 = scmp.eq.s32.totalorder %s18, 0
      %p206 = por %p204, %p205
      %p207 = scmp.ne.s32.totalorder %s199, %s201
      %p208 = scmp.eq.s32.totalorder %s23, 1
      %p209 = por %p207, %p208
      %p210 = scmp.ne.s32.totalorder %s201, %s202
      %p211 = scmp.eq.s32.totalorder %s23, 0
      %p212 = por %p210, %p211
      %p213 = scmp.ne.s32.totalorder %s201, %s202
      %p214 = scmp.eq.s32.totalorder %s24, 1
      %p215 = por %p213, %p214
      %p217 = scmp.ne.s32.totalorder %s202, %s216
      %p218 = scmp.eq.s32.totalorder %s24, 0
      %p219 = por %p217, %p218
      %s220 = ssub.s32 %s18, %s25
      %p221 = scmp.eq.s32.totalorder %s220, 0
      %s223 = sadd.s32 %s222, 1
      %s224 = scalar_select %p221, %s222, %s223
      %p227 = pneg %p221
      %p228 = scmp.eq.s32.totalorder %s18, 1
      %p229 = por %p227, %p228
      %p230 = scmp.ne.s32.totalorder %s222, %s225
      %p231 = scmp.eq.s32.totalorder %s18, 0
      %p232 = por %p230, %p231
      %p233 = scmp.ne.s32.totalorder %s222, %s225
      %p234 = scmp.eq.s32.totalorder %s23, 1
      %p235 = por %p233, %p234
      %p236 = scmp.ne.s32.totalorder %s225, %s226
      %p237 = scmp.eq.s32.totalorder %s23, 0
      %p238 = por %p236, %p237
      %p239 = scmp.ne.s32.totalorder %s225, %s226
      %p240 = scmp.eq.s32.totalorder %s24, 1
      %p241 = por %p239, %p240
      %p243 = scmp.ne.s32.totalorder %s226, %s242
      %p244 = scmp.eq.s32.totalorder %s24, 0
      %p245 = por %p243, %p244
      %p246 = scmp.le.s32.totalorder 1, %s18
      %p247 = scmp.lt.s32.totalorder %s18, 3
      %p248 = pnand %p246, %p247
      %p249 = pneg %p248
      // Predicated region
      $region9: #{tpu_custom_call.1} parent=5 // pred_check
        _
      $region10: #{tpu_custom_call.1} parent=5 // pred_check_branch
        %251 = sbr.rel (%p248) target = $region12
      $region11: #{tpu_custom_call.1} parent=5 // pred_region
        %s252 = ssub.s32 %s18, 1
        // Predicated region
        $region13: #{tpu_custom_call.1} parent=11 // pred_check
          %p253 = pneg %p65
        $region14: #{tpu_custom_call.1} parent=11 // pred_check_branch
          %255 = sbr.rel (%p253) target = $region16
        $region15: #{tpu_custom_call.1} parent=11 // pred_region
          _
        $region16: #{tpu_custom_call.1} parent=11 // pred_fallthru
          _
        // Predicated region
        $region17: #{tpu_custom_call.1} parent=11 // pred_check
          %p256 = pneg %p86
        $region18: #{tpu_custom_call.1} parent=11 // pred_check_branch
          %258 = sbr.rel (%p256) target = $region20
        $region19: #{tpu_custom_call.1} parent=11 // pred_region
          _
        $region20: #{tpu_custom_call.1} parent=11 // pred_fallthru
          _
        // Predicated region
        $region21: #{tpu_custom_call.1} parent=11 // pred_check
          %p259 = pneg %p107
        $region22: #{tpu_custom_call.1} parent=11 // pred_check_branch
          %261 = sbr.rel (%p259) target = $region24
        $region23: #{tpu_custom_call.1} parent=11 // pred_region
          _
        $region24: #{tpu_custom_call.1} parent=11 // pred_fallthru
          _
        // Predicated region
        $region25: #{tpu_custom_call.1} parent=11 // pred_check
          %p262 = pneg %p128
        $region26: #{tpu_custom_call.1} parent=11 // pred_check_branch
          %264 = sbr.rel (%p262) target = $region28
        $region27: #{tpu_custom_call.1} parent=11 // pred_region
          _
        $region28: #{tpu_custom_call.1} parent=11 // pred_fallthru
          _
        // Predicated region
        $region29: #{tpu_custom_call.1} parent=11 // pred_check
          %p265 = pneg %p149
        $region30: #{tpu_custom_call.1} parent=11 // pred_check_branch
          %267 = sbr.rel (%p265) target = $region32
        $region31: #{tpu_custom_call.1} parent=11 // pred_region
          _
        $region32: #{tpu_custom_call.1} parent=11 // pred_fallthru
          _
        // Predicated region
        $region33: #{tpu_custom_call.1} parent=11 // pred_check
          %p268 = pneg %p170
        $region34: #{tpu_custom_call.1} parent=11 // pred_check_branch
          %270 = sbr.rel (%p268) target = $region36
        $region35: #{tpu_custom_call.1} parent=11 // pred_region
          _
        $region36: #{tpu_custom_call.1} parent=11 // pred_fallthru
          _
        // Predicated region
        $region37: #{tpu_custom_call.1} parent=11 // pred_check
          %p271 = pneg %p191
        $region38: #{tpu_custom_call.1} parent=11 // pred_check_branch
          %273 = sbr.rel (%p271) target = $region40
        $region39: #{tpu_custom_call.1} parent=11 // pred_region
          _
        $region40: #{tpu_custom_call.1} parent=11 // pred_fallthru
          _
        // Predicated region
        $region41: #{tpu_custom_call.1} parent=11 // pred_check
          %p274 = pneg %p212
        $region42: #{tpu_custom_call.1} parent=11 // pred_check_branch
          %276 = sbr.rel (%p274) target = $region44
        $region43: #{tpu_custom_call.1} parent=11 // pred_region
          _
        $region44: #{tpu_custom_call.1} parent=11 // pred_fallthru
          _
      $region12: #{tpu_custom_call.1} parent=5 // pred_fallthru
        _
      %p277 = scmp.lt.s32.totalorder %s18, 2
      // Predicated region
      $region45: #{tpu_custom_call.1} parent=5 // pred_check
        %p278 = pneg %p277
      $region46: #{tpu_custom_call.1} parent=5 // pred_check_branch
        %280 = sbr.rel (%p278) target = $region48
      $region47: #{tpu_custom_call.1} parent=5 // pred_region
        // Predicated region
        $region49: #{tpu_custom_call.1} parent=47 // pred_check
          %p281 = pneg %p38
        $region50: #{tpu_custom_call.1} parent=47 // pred_check_branch
          %283 = sbr.rel (%p281) target = $region52
        $region51: #{tpu_custom_call.1} parent=47 // pred_region
          %p284 = scmp.lt.s32.totalorder %s18, 1
          %s285 = scalar_select %p284, %s18, 1
          %s286 = smul.addr %s285, 8
          %s287 = scalar_lea.vmem %s0, %s286
        $region52: #{tpu_custom_call.1} parent=47 // pred_fallthru
          _
      $region48: #{tpu_custom_call.1} parent=5 // pred_fallthru
        _
      %p288 = scmp.le.s32.totalorder 1, %s18
      %p289 = scmp.lt.s32.totalorder %s18, 3
      %p290 = pnand %p288, %p289
      %p291 = pneg %p290
      // Predicated region
      $region53: #{tpu_custom_call.1} parent=5 // pred_check
        _
      $region54: #{tpu_custom_call.1} parent=5 // pred_check_branch
        %293 = sbr.rel (%p290) target = $region56
      $region55: #{tpu_custom_call.1} parent=5 // pred_region
        %s294 = ssub.s32 %s18, 1
        %p295 = scmp.lt.s32.totalorder %s23, 1
        %s296 = scalar_select %p295, %s23, 1
        %s297 = smul.addr %s296, 8
        %s298 = scalar_lea.vmem %s0, %s297
        %p299 = pneg %p44
        %p300 = pneg %p41
        %p301 = pneg %p65
        %p302 = pneg %p62
        %p303 = pneg %p86
        %p304 = pneg %p83
        %p305 = pneg %p107
        %p306 = pneg %p104
        %p307 = pneg %p128
        %p308 = pneg %p125
        %p309 = pneg %p149
        %p310 = pneg %p146
        %p311 = pneg %p170
        %p312 = pneg %p167
        %p313 = pneg %p191
        %p314 = pneg %p188
        %p315 = pneg %p212
        %p316 = pneg %p209
        %p317 = pneg %p238
        %p318 = pneg %p235
        %s319 = sand.u32 %s225, 1
        %s320 = scalar_lea.sflag [#allocation3], %s319
        %s321 = sand.u32 %s225, 1
        %s322 = smul.addr %s321, 8
        %s323 = scalar_lea.vmem [#allocation2], %s322
        %p324 = scmp.lt.s32.totalorder %s23, 1
        %s325 = scalar_select %p324, %s23, 1
        %s326 = smul.addr %s325, 8
        %s327 = scalar_lea.vmem %s0, %s326
        %v328 = vld [vmem:[%s327] sm:$0xff]
        %v329 = vld [vmem:[%s1] sm:$0xff]
        %v330 = vld [vmem:[%s1 + $0x8] sm:$0xff]
        %v331 = vld [vmem:[%s1 + $0x10] sm:$0xff]
        %v332 = vld [vmem:[%s1 + $0x18] sm:$0xff]
        %v333 = vld [vmem:[%s1 + $0x20] sm:$0xff]
        %v334 = vld [vmem:[%s1 + $0x28] sm:$0xff]
        %v335 = vld [vmem:[%s1 + $0x30] sm:$0xff]
        %v336 = vld [vmem:[%s1 + $0x38] sm:$0xff]
        %v337 = vld [vmem:[%s1 + $0x40] sm:$0xff]
        %v338 = vld [vmem:[%s1 + $0x48] sm:$0xff]
        %v339 = vld [vmem:[%s1 + $0x50] sm:$0xff]
        %v340 = vld [vmem:[%s1 + $0x58] sm:$0xff]
        %v341 = vld [vmem:[%s1 + $0x60] sm:$0xff]
        %v342 = vld [vmem:[%s1 + $0x68] sm:$0xff]
        %v343 = vld [vmem:[%s1 + $0x70] sm:$0xff]
        %v344 = vld [vmem:[%s1 + $0x78] sm:$0xff]
        %v345 = vld [vmem:[%s4] sm:$0x1]
        %v346 = vld [vmem:[%s4 + $0x1] sm:$0x1]
        %v347 = vld [vmem:[%s4 + $0x2] sm:$0x1]
        %v348 = vld [vmem:[%s4 + $0x3] sm:$0x1]
        %v353 = vperm.slane %v345, 0
        %v354 = vperm.slane %v346, 0
        %v355 = vperm.slane %v347, 0
        %v356 = vperm.slane %v348, 0
        %vm361 = vcmask 261120
        %v363 = vsel %vm361, %v328, 0
        %365 = vmatpush.msra.mxu0 0.0
        %366 = vmatpush.msra.mxu0 0.0
        %367 = vmatpush.msra.mxu0 0.0
        %368 = vmatpush.msra.mxu0 0.0
        %369 = vmatpush.msra.mxu0 0.0
        %370 = vmatpush.msra.mxu0 0.0
        %371 = vmatpush.msra.mxu0 0.0
        %372 = vmatpush.msra.mxu0 0.0
        %373 = vmatpush.msra.mxu0 0.0
        %374 = vmatpush.msra.mxu0 0.0
        %375 = vmatpush.msra.mxu0 0.0
        %376 = vmatpush.msra.mxu0 0.0
        %377 = vmatpush.msra.mxu0 %v332
        %378 = vmatpush.msra.mxu0 %v331
        %379 = vmatpush.msra.mxu0 %v330
        %380 = vmatpush.msra.mxu0 %v329
        %381 = vmatmul.f32.gmra.mxu0 %v363
        %v382 = vpop.f32.mrf.mxu0
        %v383 = vadd.f32 %v353, %v382
        %384 = vdwg.mxu0
        %385 = vmatpush.msra.mxu0 0.0
        %386 = vmatpush.msra.mxu0 0.0
        %387 = vmatpush.msra.mxu0 0.0
        %388 = vmatpush.msra.mxu0 0.0
        %389 = vmatpush.msra.mxu0 0.0
        %390 = vmatpush.msra.mxu0 0.0
        %391 = vmatpush.msra.mxu0 0.0
        %392 = vmatpush.msra.mxu0 0.0
        %393 = vmatpush.msra.mxu0 0.0
        %394 = vmatpush.msra.mxu0 0.0
        %395 = vmatpush.msra.mxu0 0.0
        %396 = vmatpush.msra.mxu0 0.0
        %397 = vmatpush.msra.mxu0 %v336
        %398 = vmatpush.msra.mxu0 %v335
        %399 = vmatpush.msra.mxu0 %v334
        %400 = vmatpush.msra.mxu0 %v333
        %401 = vmatmul.f32.gmra.mxu0 %v363
        %v402 = vpop.f32.mrf.mxu0
        %v403 = vadd.f32 %v354, %v402
        %404 = vdwg.mxu0
        %405 = vmatpush.msra.mxu0 0.0
        %406 = vmatpush.msra.mxu0 0.0
        %407 = vmatpush.msra.mxu0 0.0
        %408 = vmatpush.msra.mxu0 0.0
        %409 = vmatpush.msra.mxu0 0.0
        %410 = vmatpush.msra.mxu0 0.0
        %411 = vmatpush.msra.mxu0 0.0
        %412 = vmatpush.msra.mxu0 0.0
        %413 = vmatpush.msra.mxu0 0.0
        %414 = vmatpush.msra.mxu0 0.0
        %415 = vmatpush.msra.mxu0 0.0
        %416 = vmatpush.msra.mxu0 0.0
        %417 = vmatpush.msra.mxu0 %v340
        %418 = vmatpush.msra.mxu0 %v339
        %419 = vmatpush.msra.mxu0 %v338
        %420 = vmatpush.msra.mxu0 %v337
        %421 = vmatmul.f32.gmra.mxu0 %v363
        %v422 = vpop.f32.mrf.mxu0
        %v423 = vadd.f32 %v355, %v422
        %424 = vdwg.mxu0
        %425 = vmatpush.msra.mxu0 0.0
        %426 = vmatpush.msra.mxu0 0.0
        %427 = vmatpush.msra.mxu0 0.0
        %428 = vmatpush.msra.mxu0 0.0
        %429 = vmatpush.msra.mxu0 0.0
        %430 = vmatpush.msra.mxu0 0.0
        %431 = vmatpush.msra.mxu0 0.0
        %432 = vmatpush.msra.mxu0 0.0
        %433 = vmatpush.msra.mxu0 0.0
        %434 = vmatpush.msra.mxu0 0.0
        %435 = vmatpush.msra.mxu0 0.0
        %436 = vmatpush.msra.mxu0 0.0
        %437 = vmatpush.msra.mxu0 %v344
        %438 = vmatpush.msra.mxu0 %v343
        %439 = vmatpush.msra.mxu0 %v342
        %440 = vmatpush.msra.mxu0 %v341
        %441 = vmatmul.f32.gmra.mxu0 %v363
        %v442 = vpop.f32.mrf.mxu0
        %v443 = vadd.f32 %v356, %v442
        %444 = vdwg.mxu0
        %v445 = vld [vmem:[%s2] sm:$0xff]
        %v446 = vld [vmem:[%s2 + $0x8] sm:$0xff]
        %v447 = vld [vmem:[%s2 + $0x10] sm:$0xff]
        %v448 = vld [vmem:[%s2 + $0x18] sm:$0xff]
        %v449 = vld [vmem:[%s2 + $0x20] sm:$0xff]
        %v450 = vld [vmem:[%s2 + $0x28] sm:$0xff]
        %v451 = vld [vmem:[%s2 + $0x30] sm:$0xff]
        %v452 = vld [vmem:[%s2 + $0x38] sm:$0xff]
        %v453 = vld [vmem:[%s2 + $0x40] sm:$0xff]
        %v454 = vld [vmem:[%s2 + $0x48] sm:$0xff]
        %v455 = vld [vmem:[%s2 + $0x50] sm:$0xff]
        %v456 = vld [vmem:[%s2 + $0x58] sm:$0xff]
        %v457 = vld [vmem:[%s2 + $0x60] sm:$0xff]
        %v458 = vld [vmem:[%s2 + $0x68] sm:$0xff]
        %v459 = vld [vmem:[%s2 + $0x70] sm:$0xff]
        %v460 = vld [vmem:[%s2 + $0x78] sm:$0xff]
        %v461 = vld [vmem:[%s5] sm:$0x1]
        %v462 = vld [vmem:[%s5 + $0x1] sm:$0x1]
        %v463 = vld [vmem:[%s5 + $0x2] sm:$0x1]
        %v464 = vld [vmem:[%s5 + $0x3] sm:$0x1]
        %v469 = vperm.slane %v461, 0
        %v470 = vperm.slane %v462, 0
        %v471 = vperm.slane %v463, 0
        %v472 = vperm.slane %v464, 0
        %477 = vmatpush.msra.mxu0 0.0
        %478 = vmatpush.msra.mxu0 0.0
        %479 = vmatpush.msra.mxu0 0.0
        %480 = vmatpush.msra.mxu0 0.0
        %481 = vmatpush.msra.mxu0 0.0
        %482 = vmatpush.msra.mxu0 0.0
        %483 = vmatpush.msra.mxu0 0.0
        %484 = vmatpush.msra.mxu0 0.0
        %485 = vmatpush.msra.mxu0 0.0
        %486 = vmatpush.msra.mxu0 0.0
        %487 = vmatpush.msra.mxu0 0.0
        %488 = vmatpush.msra.mxu0 0.0
        %489 = vmatpush.msra.mxu0 %v448
        %490 = vmatpush.msra.mxu0 %v447
        %491 = vmatpush.msra.mxu0 %v446
        %492 = vmatpush.msra.mxu0 %v445
        %493 = vmatmul.f32.gmra.mxu0 %v363
        %v494 = vpop.f32.mrf.mxu0
        %v495 = vadd.f32 %v469, %v494
        %496 = vdwg.mxu0
        %497 = vmatpush.msra.mxu0 0.0
        %498 = vmatpush.msra.mxu0 0.0
        %499 = vmatpush.msra.mxu0 0.0
        %500 = vmatpush.msra.mxu0 0.0
        %501 = vmatpush.msra.mxu0 0.0
        %502 = vmatpush.msra.mxu0 0.0
        %503 = vmatpush.msra.mxu0 0.0
        %504 = vmatpush.msra.mxu0 0.0
        %505 = vmatpush.msra.mxu0 0.0
        %506 = vmatpush.msra.mxu0 0.0
        %507 = vmatpush.msra.mxu0 0.0
        %508 = vmatpush.msra.mxu0 0.0
        %509 = vmatpush.msra.mxu0 %v452
        %510 = vmatpush.msra.mxu0 %v451
        %511 = vmatpush.msra.mxu0 %v450
        %512 = vmatpush.msra.mxu0 %v449
        %513 = vmatmul.f32.gmra.mxu0 %v363
        %v514 = vpop.f32.mrf.mxu0
        %v515 = vadd.f32 %v470, %v514
        %516 = vdwg.mxu0
        %517 = vmatpush.msra.mxu0 0.0
        %518 = vmatpush.msra.mxu0 0.0
        %519 = vmatpush.msra.mxu0 0.0
        %520 = vmatpush.msra.mxu0 0.0
        %521 = vmatpush.msra.mxu0 0.0
        %522 = vmatpush.msra.mxu0 0.0
        %523 = vmatpush.msra.mxu0 0.0
        %524 = vmatpush.msra.mxu0 0.0
        %525 = vmatpush.msra.mxu0 0.0
        %526 = vmatpush.msra.mxu0 0.0
        %527 = vmatpush.msra.mxu0 0.0
        %528 = vmatpush.msra.mxu0 0.0
        %529 = vmatpush.msra.mxu0 %v456
        %530 = vmatpush.msra.mxu0 %v455
        %531 = vmatpush.msra.mxu0 %v454
        %532 = vmatpush.msra.mxu0 %v453
        %533 = vmatmul.f32.gmra.mxu0 %v363
        %v534 = vpop.f32.mrf.mxu0
        %v535 = vadd.f32 %v471, %v534
        %536 = vdwg.mxu0
        %537 = vmatpush.msra.mxu0 0.0
        %538 = vmatpush.msra.mxu0 0.0
        %539 = vmatpush.msra.mxu0 0.0
        %540 = vmatpush.msra.mxu0 0.0
        %541 = vmatpush.msra.mxu0 0.0
        %542 = vmatpush.msra.mxu0 0.0
        %543 = vmatpush.msra.mxu0 0.0
        %544 = vmatpush.msra.mxu0 0.0
        %545 = vmatpush.msra.mxu0 0.0
        %546 = vmatpush.msra.mxu0 0.0
        %547 = vmatpush.msra.mxu0 0.0
        %548 = vmatpush.msra.mxu0 0.0
        %549 = vmatpush.msra.mxu0 %v460
        %550 = vmatpush.msra.mxu0 %v459
        %551 = vmatpush.msra.mxu0 %v458
        %552 = vmatpush.msra.mxu0 %v457
        %553 = vmatmul.f32.gmra.mxu0 %v363
        %v554 = vpop.f32.mrf.mxu0
        %v555 = vadd.f32 %v472, %v554
        %556 = vdwg.mxu0
        %v557 = vld [vmem:[%s3] sm:$0xff]
        %v558 = vld [vmem:[%s3 + $0x8] sm:$0xff]
        %v559 = vld [vmem:[%s3 + $0x10] sm:$0xff]
        %v560 = vld [vmem:[%s3 + $0x18] sm:$0xff]
        %v561 = vld [vmem:[%s3 + $0x20] sm:$0xff]
        %v562 = vld [vmem:[%s3 + $0x28] sm:$0xff]
        %v563 = vld [vmem:[%s3 + $0x30] sm:$0xff]
        %v564 = vld [vmem:[%s3 + $0x38] sm:$0xff]
        %v565 = vld [vmem:[%s3 + $0x40] sm:$0xff]
        %v566 = vld [vmem:[%s3 + $0x48] sm:$0xff]
        %v567 = vld [vmem:[%s3 + $0x50] sm:$0xff]
        %v568 = vld [vmem:[%s3 + $0x58] sm:$0xff]
        %v569 = vld [vmem:[%s3 + $0x60] sm:$0xff]
        %v570 = vld [vmem:[%s3 + $0x68] sm:$0xff]
        %v571 = vld [vmem:[%s3 + $0x70] sm:$0xff]
        %v572 = vld [vmem:[%s3 + $0x78] sm:$0xff]
        %v573 = vld [vmem:[%s6] sm:$0x1]
        %v574 = vld [vmem:[%s6 + $0x1] sm:$0x1]
        %v575 = vld [vmem:[%s6 + $0x2] sm:$0x1]
        %v576 = vld [vmem:[%s6 + $0x3] sm:$0x1]
        %v581 = vperm.slane %v573, 0
        %v582 = vperm.slane %v574, 0
        %v583 = vperm.slane %v575, 0
        %v584 = vperm.slane %v576, 0
        %589 = vmatpush.msra.mxu0 0.0
        %590 = vmatpush.msra.mxu0 0.0
        %591 = vmatpush.msra.mxu0 0.0
        %592 = vmatpush.msra.mxu0 0.0
        %593 = vmatpush.msra.mxu0 0.0
        %594 = vmatpush.msra.mxu0 0.0
        %595 = vmatpush.msra.mxu0 0.0
        %596 = vmatpush.msra.mxu0 0.0
        %597 = vmatpush.msra.mxu0 0.0
        %598 = vmatpush.msra.mxu0 0.0
        %599 = vmatpush.msra.mxu0 0.0
        %600 = vmatpush.msra.mxu0 0.0
        %601 = vmatpush.msra.mxu0 %v560
        %602 = vmatpush.msra.mxu0 %v559
        %603 = vmatpush.msra.mxu0 %v558
        %604 = vmatpush.msra.mxu0 %v557
        %605 = vmatmul.f32.gmra.mxu0 %v363
        %v606 = vpop.f32.mrf.mxu0
        %v607 = vadd.f32 %v581, %v606
        %608 = vdwg.mxu0
        %609 = vmatpush.msra.mxu0 0.0
        %610 = vmatpush.msra.mxu0 0.0
        %611 = vmatpush.msra.mxu0 0.0
        %612 = vmatpush.msra.mxu0 0.0
        %613 = vmatpush.msra.mxu0 0.0
        %614 = vmatpush.msra.mxu0 0.0
        %615 = vmatpush.msra.mxu0 0.0
        %616 = vmatpush.msra.mxu0 0.0
        %617 = vmatpush.msra.mxu0 0.0
        %618 = vmatpush.msra.mxu0 0.0
        %619 = vmatpush.msra.mxu0 0.0
        %620 = vmatpush.msra.mxu0 0.0
        %621 = vmatpush.msra.mxu0 %v564
        %622 = vmatpush.msra.mxu0 %v563
        %623 = vmatpush.msra.mxu0 %v562
        %624 = vmatpush.msra.mxu0 %v561
        %625 = vmatmul.f32.gmra.mxu0 %v363
        %v626 = vpop.f32.mrf.mxu0
        %v627 = vadd.f32 %v582, %v626
        %628 = vdwg.mxu0
        %629 = vmatpush.msra.mxu0 0.0
        %630 = vmatpush.msra.mxu0 0.0
        %631 = vmatpush.msra.mxu0 0.0
        %632 = vmatpush.msra.mxu0 0.0
        %633 = vmatpush.msra.mxu0 0.0
        %634 = vmatpush.msra.mxu0 0.0
        %635 = vmatpush.msra.mxu0 0.0
        %636 = vmatpush.msra.mxu0 0.0
        %637 = vmatpush.msra.mxu0 0.0
        %638 = vmatpush.msra.mxu0 0.0
        %639 = vmatpush.msra.mxu0 0.0
        %640 = vmatpush.msra.mxu0 0.0
        %641 = vmatpush.msra.mxu0 %v568
        %642 = vmatpush.msra.mxu0 %v567
        %643 = vmatpush.msra.mxu0 %v566
        %644 = vmatpush.msra.mxu0 %v565
        %645 = vmatmul.f32.gmra.mxu0 %v363
        %v646 = vpop.f32.mrf.mxu0
        %v647 = vadd.f32 %v583, %v646
        %648 = vdwg.mxu0
        %649 = vmatpush.msra.mxu0 0.0
        %650 = vmatpush.msra.mxu0 0.0
        %651 = vmatpush.msra.mxu0 0.0
        %652 = vmatpush.msra.mxu0 0.0
        %653 = vmatpush.msra.mxu0 0.0
        %654 = vmatpush.msra.mxu0 0.0
        %655 = vmatpush.msra.mxu0 0.0
        %656 = vmatpush.msra.mxu0 0.0
        %657 = vmatpush.msra.mxu0 0.0
        %658 = vmatpush.msra.mxu0 0.0
        %659 = vmatpush.msra.mxu0 0.0
        %660 = vmatpush.msra.mxu0 0.0
        %661 = vmatpush.msra.mxu0 %v572
        %662 = vmatpush.msra.mxu0 %v571
        %663 = vmatpush.msra.mxu0 %v570
        %664 = vmatpush.msra.mxu0 %v569
        %665 = vmatmul.f32.gmra.mxu0 %v363
        %v666 = vpop.f32.mrf.mxu0
        %v667 = vadd.f32 %v584, %v666
        %668 = vdwg.mxu0
        %vm669 = vcmask 64512
        %v671 = vsel %vm669, %v383, 0
        %v674 = vsel %vm669, %v495, 0
        %676 = vmatpush.xpose.msra.mxu0 0.0
        %677 = vmatpush.xpose.msra.mxu0 0.0
        %678 = vmatpush.xpose.msra.mxu0 0.0
        %679 = vmatpush.xpose.msra.mxu0 0.0
        %680 = vmatpush.xpose.msra.mxu0 0.0
        %681 = vmatpush.xpose.msra.mxu0 0.0
        %682 = vmatpush.xpose.msra.mxu0 0.0
        %683 = vmatpush.xpose.msra.mxu0 0.0
        %684 = vmatpush.xpose.msra.mxu0 0.0
        %685 = vmatpush.xpose.msra.mxu0 0.0
        %686 = vmatpush.xpose.msra.mxu0 0.0
        %687 = vmatpush.xpose.msra.mxu0 0.0
        %688 = vmatpush.xpose.msra.mxu0 0.0
        %689 = vmatpush.xpose.msra.mxu0 0.0
        %690 = vmatpush.xpose.msra.mxu0 0.0
        %691 = vmatpush.xpose.msra.mxu0 %v674
        %692 = vmatmul.f32.gmra.mxu0 %v671
        %v693 = vpop.f32.mrf.mxu0
        %v694 = vadd.f32 0.0, %v693
        %695 = vdwg.mxu0
        %v697 = vsel %vm669, %v403, 0
        %v700 = vsel %vm669, %v515, 0
        %702 = vmatpush.xpose.msra.mxu0 0.0
        %703 = vmatpush.xpose.msra.mxu0 0.0
        %704 = vmatpush.xpose.msra.mxu0 0.0
        %705 = vmatpush.xpose.msra.mxu0 0.0
        %706 = vmatpush.xpose.msra.mxu0 0.0
        %707 = vmatpush.xpose.msra.mxu0 0.0
        %708 = vmatpush.xpose.msra.mxu0 0.0
        %709 = vmatpush.xpose.msra.mxu0 0.0
        %710 = vmatpush.xpose.msra.mxu0 0.0
        %711 = vmatpush.xpose.msra.mxu0 0.0
        %712 = vmatpush.xpose.msra.mxu0 0.0
        %713 = vmatpush.xpose.msra.mxu0 0.0
        %714 = vmatpush.xpose.msra.mxu0 0.0
        %715 = vmatpush.xpose.msra.mxu0 0.0
        %716 = vmatpush.xpose.msra.mxu0 0.0
        %717 = vmatpush.xpose.msra.mxu0 %v700
        %718 = vmatmul.f32.gmra.mxu0 %v697
        %v719 = vpop.f32.mrf.mxu0
        %v720 = vadd.f32 0.0, %v719
        %721 = vdwg.mxu0
        %v723 = vsel %vm669, %v423, 0
        %v726 = vsel %vm669, %v535, 0
        %728 = vmatpush.xpose.msra.mxu0 0.0
        %729 = vmatpush.xpose.msra.mxu0 0.0
        %730 = vmatpush.xpose.msra.mxu0 0.0
        %731 = vmatpush.xpose.msra.mxu0 0.0
        %732 = vmatpush.xpose.msra.mxu0 0.0
        %733 = vmatpush.xpose.msra.mxu0 0.0
        %734 = vmatpush.xpose.msra.mxu0 0.0
        %735 = vmatpush.xpose.msra.mxu0 0.0
        %736 = vmatpush.xpose.msra.mxu0 0.0
        %737 = vmatpush.xpose.msra.mxu0 0.0
        %738 = vmatpush.xpose.msra.mxu0 0.0
        %739 = vmatpush.xpose.msra.mxu0 0.0
        %740 = vmatpush.xpose.msra.mxu0 0.0
        %741 = vmatpush.xpose.msra.mxu0 0.0
        %742 = vmatpush.xpose.msra.mxu0 0.0
        %743 = vmatpush.xpose.msra.mxu0 %v726
        %744 = vmatmul.f32.gmra.mxu0 %v723
        %v745 = vpop.f32.mrf.mxu0
        %v746 = vadd.f32 0.0, %v745
        %747 = vdwg.mxu0
        %v749 = vsel %vm669, %v443, 0
        %v752 = vsel %vm669, %v555, 0
        %754 = vmatpush.xpose.msra.mxu0 0.0
        %755 = vmatpush.xpose.msra.mxu0 0.0
        %756 = vmatpush.xpose.msra.mxu0 0.0
        %757 = vmatpush.xpose.msra.mxu0 0.0
        %758 = vmatpush.xpose.msra.mxu0 0.0
        %759 = vmatpush.xpose.msra.mxu0 0.0
        %760 = vmatpush.xpose.msra.mxu0 0.0
        %761 = vmatpush.xpose.msra.mxu0 0.0
        %762 = vmatpush.xpose.msra.mxu0 0.0
        %763 = vmatpush.xpose.msra.mxu0 0.0
        %764 = vmatpush.xpose.msra.mxu0 0.0
        %765 = vmatpush.xpose.msra.mxu0 0.0
        %766 = vmatpush.xpose.msra.mxu0 0.0
        %767 = vmatpush.xpose.msra.mxu0 0.0
        %768 = vmatpush.xpose.msra.mxu0 0.0
        %769 = vmatpush.xpose.msra.mxu0 %v752
        %770 = vmatmul.f32.gmra.mxu0 %v749
        %v771 = vpop.f32.mrf.mxu0
        %v772 = vadd.f32 0.0, %v771
        %773 = vdwg.mxu0
        %v774 = vmul.f32 %v694, 0.35355338
        %v775 = vmul.f32 %v720, 0.35355338
        %v776 = vmul.f32 %v746, 0.35355338
        %v777 = vmul.f32 %v772, 0.35355338
        %v778 = vsel %vm669, %v774, -inf
        %779 = vmax.xlane.f32.xlu0 %v778
        %v780 = vpop.xlane.xlu0 %779
        %v781 = vsel %vm669, %v775, -inf
        %782 = vmax.xlane.f32.xlu0 %v781
        %v783 = vpop.xlane.xlu0 %782
        %v784 = vsel %vm669, %v776, -inf
        %785 = vmax.xlane.f32.xlu0 %v784
        %v786 = vpop.xlane.xlu0 %785
        %v787 = vsel %vm669, %v777, -inf
        %788 = vmax.xlane.f32.xlu0 %v787
        %v789 = vpop.xlane.xlu0 %788
        %v790 = vsub.f32 %v774, %v780
        %v791 = vsub.f32 %v775, %v783
        %v792 = vsub.f32 %v776, %v786
        %v793 = vsub.f32 %v777, %v789
        %v794 = vmul.f32 %v790, 1.442695
        %v795 = vpow.pop %v794
        %v796 = vmul.f32 %v791, 1.442695
        %v797 = vpow.pop %v796
        %v798 = vmul.f32 %v792, 1.442695
        %v799 = vpow.pop %v798
        %v800 = vmul.f32 %v793, 1.442695
        %v801 = vpow.pop %v800
        %v802 = vsel %vm669, %v795, 0.0
        %803 = vadd.xlane.f32.xlu0 %v802
        %v804 = vpop.xlane.xlu0 %803
        %v805 = vsel %vm669, %v797, 0.0
        %806 = vadd.xlane.f32.xlu0 %v805
        %v807 = vpop.xlane.xlu0 %806
        %v808 = vsel %vm669, %v799, 0.0
        %809 = vadd.xlane.f32.xlu0 %v808
        %v810 = vpop.xlane.xlu0 %809
        %v811 = vsel %vm669, %v801, 0.0
        %812 = vadd.xlane.f32.xlu0 %v811
        %v813 = vpop.xlane.xlu0 %812
        %v814 = vrcp.pop %v804
        %v815 = vrcp.pop %v807
        %v816 = vrcp.pop %v810
        %v817 = vrcp.pop %v813
        %v818 = vmul.f32 %v795, %v814
        %v819 = vmul.f32 %v797, %v815
        %v820 = vmul.f32 %v799, %v816
        %v821 = vmul.f32 %v801, %v817
        %v823 = vsel %vm669, %v818, 0
        %825 = vmatpush.msra.mxu0 0.0
        %826 = vmatpush.msra.mxu0 0.0
        %827 = vmatpush.msra.mxu0 0.0
        %828 = vmatpush.msra.mxu0 0.0
        %829 = vmatpush.msra.mxu0 0.0
        %830 = vmatpush.msra.mxu0 0.0
        %831 = vmatpush.msra.mxu0 0.0
        %832 = vmatpush.msra.mxu0 0.0
        %833 = vmatpush.msra.mxu0 0.0
        %834 = vmatpush.msra.mxu0 0.0
        %835 = vmatpush.msra.mxu0 0.0
        %836 = vmatpush.msra.mxu0 0.0
        %837 = vmatpush.msra.mxu0 0.0
        %838 = vmatpush.msra.mxu0 0.0
        %839 = vmatpush.msra.mxu0 0.0
        %840 = vmatpush.msra.mxu0 %v607
        %841 = vmatmul.f32.gmra.mxu0 %v823
        %v842 = vpop.f32.mrf.mxu0
        %v843 = vadd.f32 0.0, %v842
        %844 = vdwg.mxu0
        %v846 = vsel %vm669, %v819, 0
        %848 = vmatpush.msra.mxu0 0.0
        %849 = vmatpush.msra.mxu0 0.0
        %850 = vmatpush.msra.mxu0 0.0
        %851 = vmatpush.msra.mxu0 0.0
        %852 = vmatpush.msra.mxu0 0.0
        %853 = vmatpush.msra.mxu0 0.0
        %854 = vmatpush.msra.mxu0 0.0
        %855 = vmatpush.msra.mxu0 0.0
        %856 = vmatpush.msra.mxu0 0.0
        %857 = vmatpush.msra.mxu0 0.0
        %858 = vmatpush.msra.mxu0 0.0
        %859 = vmatpush.msra.mxu0 0.0
        %860 = vmatpush.msra.mxu0 0.0
        %861 = vmatpush.msra.mxu0 0.0
        %862 = vmatpush.msra.mxu0 0.0
        %863 = vmatpush.msra.mxu0 %v627
        %864 = vmatmul.f32.gmra.mxu0 %v846
        %v865 = vpop.f32.mrf.mxu0
        %v866 = vadd.f32 0.0, %v865
        %867 = vdwg.mxu0
        %v869 = vsel %vm669, %v820, 0
        %871 = vmatpush.msra.mxu0 0.0
        %872 = vmatpush.msra.mxu0 0.0
        %873 = vmatpush.msra.mxu0 0.0
        %874 = vmatpush.msra.mxu0 0.0
        %875 = vmatpush.msra.mxu0 0.0
        %876 = vmatpush.msra.mxu0 0.0
        %877 = vmatpush.msra.mxu0 0.0
        %878 = vmatpush.msra.mxu0 0.0
        %879 = vmatpush.msra.mxu0 0.0
        %880 = vmatpush.msra.mxu0 0.0
        %881 = vmatpush.msra.mxu0 0.0
        %882 = vmatpush.msra.mxu0 0.0
        %883 = vmatpush.msra.mxu0 0.0
        %884 = vmatpush.msra.mxu0 0.0
        %885 = vmatpush.msra.mxu0 0.0
        %886 = vmatpush.msra.mxu0 %v647
        %887 = vmatmul.f32.gmra.mxu0 %v869
        %v888 = vpop.f32.mrf.mxu0
        %v889 = vadd.f32 0.0, %v888
        %890 = vdwg.mxu0
        %v892 = vsel %vm669, %v821, 0
        %894 = vmatpush.msra.mxu0 0.0
        %895 = vmatpush.msra.mxu0 0.0
        %896 = vmatpush.msra.mxu0 0.0
        %897 = vmatpush.msra.mxu0 0.0
        %898 = vmatpush.msra.mxu0 0.0
        %899 = vmatpush.msra.mxu0 0.0
        %900 = vmatpush.msra.mxu0 0.0
        %901 = vmatpush.msra.mxu0 0.0
        %902 = vmatpush.msra.mxu0 0.0
        %903 = vmatpush.msra.mxu0 0.0
        %904 = vmatpush.msra.mxu0 0.0
        %905 = vmatpush.msra.mxu0 0.0
        %906 = vmatpush.msra.mxu0 0.0
        %907 = vmatpush.msra.mxu0 0.0
        %908 = vmatpush.msra.mxu0 0.0
        %909 = vmatpush.msra.mxu0 %v667
        %910 = vmatmul.f32.gmra.mxu0 %v892
        %v911 = vpop.f32.mrf.mxu0
        %v912 = vadd.f32 0.0, %v911
        %913 = vdwg.mxu0
        %v914 = vld [vmem:[%s7] sm:$0xff]
        %v915 = vld [vmem:[%s7 + $0x8] sm:$0xff]
        %v916 = vld [vmem:[%s7 + $0x10] sm:$0xff]
        %v917 = vld [vmem:[%s7 + $0x18] sm:$0xff]
        %v919 = vsel %vm669, %v843, 0
        %921 = vmatpush.msra.mxu0 0.0
        %922 = vmatpush.msra.mxu0 0.0
        %923 = vmatpush.msra.mxu0 0.0
        %924 = vmatpush.msra.mxu0 0.0
        %925 = vmatpush.msra.mxu0 0.0
        %926 = vmatpush.msra.mxu0 0.0
        %927 = vmatpush.msra.mxu0 0.0
        %928 = vmatpush.msra.mxu0 0.0
        %929 = vmatpush.msra.mxu0 0.0
        %930 = vmatpush.msra.mxu0 0.0
        %931 = vmatpush.msra.mxu0 0.0
        %932 = vmatpush.msra.mxu0 0.0
        %933 = vmatpush.msra.mxu0 0.0
        %934 = vmatpush.msra.mxu0 0.0
        %935 = vmatpush.msra.mxu0 0.0
        %936 = vmatpush.msra.mxu0 %v914
        %937 = vmatmul.f32.gmra.mxu0 %v919
        %v938 = vpop.f32.mrf.mxu0
        %v939 = vadd.f32 0.0, %v938
        %940 = vdwg.mxu0
        %v942 = vsel %vm669, %v866, 0
        %944 = vmatpush.msra.mxu0 0.0
        %945 = vmatpush.msra.mxu0 0.0
        %946 = vmatpush.msra.mxu0 0.0
        %947 = vmatpush.msra.mxu0 0.0
        %948 = vmatpush.msra.mxu0 0.0
        %949 = vmatpush.msra.mxu0 0.0
        %950 = vmatpush.msra.mxu0 0.0
        %951 = vmatpush.msra.mxu0 0.0
        %952 = vmatpush.msra.mxu0 0.0
        %953 = vmatpush.msra.mxu0 0.0
        %954 = vmatpush.msra.mxu0 0.0
        %955 = vmatpush.msra.mxu0 0.0
        %956 = vmatpush.msra.mxu0 0.0
        %957 = vmatpush.msra.mxu0 0.0
        %958 = vmatpush.msra.mxu0 0.0
        %959 = vmatpush.msra.mxu0 %v915
        %960 = vmatmul.f32.gmra.mxu0 %v942
        %v961 = vpop.f32.mrf.mxu0
        %v962 = vadd.f32 0.0, %v961
        %963 = vdwg.mxu0
        %v965 = vsel %vm669, %v889, 0
        %967 = vmatpush.msra.mxu0 0.0
        %968 = vmatpush.msra.mxu0 0.0
        %969 = vmatpush.msra.mxu0 0.0
        %970 = vmatpush.msra.mxu0 0.0
        %971 = vmatpush.msra.mxu0 0.0
        %972 = vmatpush.msra.mxu0 0.0
        %973 = vmatpush.msra.mxu0 0.0
        %974 = vmatpush.msra.mxu0 0.0
        %975 = vmatpush.msra.mxu0 0.0
        %976 = vmatpush.msra.mxu0 0.0
        %977 = vmatpush.msra.mxu0 0.0
        %978 = vmatpush.msra.mxu0 0.0
        %979 = vmatpush.msra.mxu0 0.0
        %980 = vmatpush.msra.mxu0 0.0
        %981 = vmatpush.msra.mxu0 0.0
        %982 = vmatpush.msra.mxu0 %v916
        %983 = vmatmul.f32.gmra.mxu0 %v965
        %v984 = vpop.f32.mrf.mxu0
        %v985 = vadd.f32 0.0, %v984
        %986 = vdwg.mxu0
        %v988 = vsel %vm669, %v912, 0
        %990 = vmatpush.msra.mxu0 0.0
        %991 = vmatpush.msra.mxu0 0.0
        %992 = vmatpush.msra.mxu0 0.0
        %993 = vmatpush.msra.mxu0 0.0
        %994 = vmatpush.msra.mxu0 0.0
        %995 = vmatpush.msra.mxu0 0.0
        %996 = vmatpush.msra.mxu0 0.0
        %997 = vmatpush.msra.mxu0 0.0
        %998 = vmatpush.msra.mxu0 0.0
        %999 = vmatpush.msra.mxu0 0.0
        %1000 = vmatpush.msra.mxu0 0.0
        %1001 = vmatpush.msra.mxu0 0.0
        %1002 = vmatpush.msra.mxu0 0.0
        %1003 = vmatpush.msra.mxu0 0.0
        %1004 = vmatpush.msra.mxu0 0.0
        %1005 = vmatpush.msra.mxu0 %v917
        %1006 = vmatmul.f32.gmra.mxu0 %v988
        %v1007 = vpop.f32.mrf.mxu0
        %v1008 = vadd.f32 0.0, %v1007
        %1009 = vdwg.mxu0
        %v1010 = vsel %vm361, %v939, 0.0
        %v1011 = vsel %vm361, %v962, 0.0
        %v1012 = vadd.f32 %v1010, %v1011
        %v1013 = vsel %vm361, %v985, 0.0
        %v1014 = vadd.f32 %v1012, %v1013
        %v1015 = vsel %vm361, %v1008, 0.0
        %v1016 = vadd.f32 %v1014, %v1015
        %v1017 = vld [vmem:[%s8] sm:$0x1]
        %v1019 = vperm.slane %v1017, 0
        %v1021 = vadd.f32 %v1016, %v1019
        %1022 = vst.msk [vmem:[%s323] sm:$0xff] %vm361, %v1021
        %s1023 = sand.u32 %s225, 1
        %s1024 = scalar_lea.sflag [#allocation3], %s1023
        %s1025 = sand.u32 %s225, 1
        %s1026 = smul.addr %s1025, 8
        %s1027 = scalar_lea.vmem [#allocation2], %s1026
        // Predicated region
        $region57: #{tpu_custom_call.1} parent=55 // pred_check
          %p1028 = pneg %p235
        $region58: #{tpu_custom_call.1} parent=55 // pred_check_branch
          %1030 = sbr.rel (%p1028) target = $region60
        $region59: #{tpu_custom_call.1} parent=55 // pred_region
          %1032 = vsyncadd %s1024, 0
          %s1033 = smul.addr %s23, 8
          %s1034 = scalar_lea.hbm %s9, %s1033
          %s1036 = sshll.u32 %s1027, 4
          %s1037 = int_to_ptr.vmem [resolvable:$true] %s1036
          %s1038 = sshll.u32 %s1034, 4
          %s1039 = int_to_ptr.hbm [resolvable:$true] %s1038
          %1041 = dma.vmem_to_hbm [thread:$0]  %s1037, 128, %s1039, %s1024
        $region60: #{tpu_custom_call.1} parent=55 // pred_fallthru
          _
      $region56: #{tpu_custom_call.1} parent=5 // pred_fallthru
        _
      %p1042 = scmp.le.s32.totalorder 2, %s18
      // Predicated region
      $region61: #{tpu_custom_call.1} parent=5 // pred_check
        %p1043 = pneg %p1042
      $region62: #{tpu_custom_call.1} parent=5 // pred_check_branch
        %1045 = sbr.rel (%p1043) target = $region64
      $region63: #{tpu_custom_call.1} parent=5 // pred_region
        %s1046 = ssub.s32 %s18, 2
        // Predicated region
        $region65: #{tpu_custom_call.1} parent=63 // pred_check
          %p1047 = pneg %p241
        $region66: #{tpu_custom_call.1} parent=63 // pred_check_branch
          %1049 = sbr.rel (%p1047) target = $region68
        $region67: #{tpu_custom_call.1} parent=63 // pred_region
          %s1050 = sand.u32 %s226, 1
          %s1051 = scalar_lea.sflag [#allocation3], %s1050
          %s1052 = sand.u32 %s226, 1
          %s1053 = smul.addr %s1052, 8
          %s1054 = scalar_lea.vmem [#allocation2], %s1053
          %1056 = dma.done %s1051, 128
        $region68: #{tpu_custom_call.1} parent=63 // pred_fallthru
          _
      $region64: #{tpu_custom_call.1} parent=5 // pred_fallthru
        _
    $region6: #{tpu_custom_call.1} parent=1 // loop_footer
      %s22 = sadd.s32 1, %s18
    $region7: #{tpu_custom_call.1} parent=1 // loop_footer_branch
      %17 = sbr.rel target = $region3
    $region8: #{tpu_custom_call.1} parent=1 // loop_exit
      _
    %1057 = vsyncpa [#allocation3], 1
    %s1058 = scalar_lea.sflag [#allocation3], 1
    %1059 = vsyncpa %s1058, 1

</llo_original>
